<compile_context>
chip_gen: v7x
topology: tpu7x:2x2x1
jax: 0.10.0
libtpu: 0.0.40
codegen_flags: <defaults>
</compile_context>

<pallas_src>
import jax
import jax.numpy as jnp
import numpy as np
from jax.experimental import pallas as pl
from jax.experimental.pallas import tpu as pltpu

_LANES = 128


def _round_down(a, b):
    return (a // b) * b


def _sublane_multiple(*dtypes):
    """Row-block multiple so every stream meets its native (sublane, 128) tile."""
    m = 8
    for dt in dtypes:
        m = max(m, 32 // max(1, np.dtype(dt).itemsize))  # f32:8, bf16:16, int8:32
    return m


def _chip_config():
    """(max_row_block, wanted_splits, vmem_limit_bytes) per TPU generation."""
    try:
        kind = jax.devices()[0].device_kind.lower()
    except Exception:
        kind = ""
    if "7" in kind:       # v7x: 2 TCs, ~3.2 TB/s HBM, 64 MiB VMEM/TC -> big tiles
        return 4096, 2, 48 * 1024 * 1024
    if "v6" in kind or "6e" in kind:   # v6e: 1 TC, 32 MiB scoped default is plenty
        return 2048, 1, None
    if "v5" in kind or "5e" in kind:   # v5e: 1 TC, 16 MiB scoped default
        return 2048, 1, None
    return 1024, 1, None               # unknown chip: conservative


def _focal_bce_kernel(x_ref, t_ref, o_ref, acc_ref):
    """Summed BCE(sigmoid(sigmoid(x)), t) over a stream of (row_block, 128) tiles."""
    s = pl.program_id(1)                      # reduction ("arbitrary") axis

    @pl.when(s == 0)
    def _():
        acc_ref[...] = jnp.zeros_like(acc_ref)

    x = x_ref[...].astype(jnp.float32)
    t = t_ref[...].astype(jnp.float32)

    # Inner sigmoid via the tanh identity: 1 EUP op instead of exp + reciprocal.
    z = 0.5 * jnp.tanh(0.5 * x) + 0.5
    # Outer sigmoid + BCE folded into softplus(z) - t*z.  z in (0,1) so
    # p = sigmoid(z) in (0.5, 0.731): torch's -100 log clamps can never fire and
    # log1p(exp(z)) is numerically safe as written.
    # TODO(synk): if a v7x bundle dump shows the EUP slot binding, swap
    # log1p(exp(z)) for a VALU-only minimax polynomial on z in (0,1).
    bce = jnp.log1p(jnp.exp(z)) - t * z

    rb, lanes = bce.shape
    # Fold (rb,128) -> (8,128) with pure VALU vreg adds; one XLU reduce at the end.
    acc_ref[...] += bce.reshape(rb // 8, 8, lanes).sum(axis=0)

    @pl.when(s == pl.num_programs(1) - 1)
    def _():
        o_ref[...] = jnp.sum(acc_ref[...]).reshape(1, 1, 1)


def _bce_sum_tail(x, t):
    """Plain-jnp summed BCE on a (small) 1-D tail, same math as the kernel."""
    x = x.astype(jnp.float32)
    t = t.astype(jnp.float32)
    z = jax.nn.sigmoid(x)
    return jnp.sum(jnp.log1p(jnp.exp(z)) - t * z)


def my_focal_loss(inputs, targets, alpha=0.1, gamma=2.0):
    x = jnp.reshape(inputs, (-1,))
    t = jnp.reshape(targets, (-1,))
    n = x.shape[0]

    max_rows, wanted_splits, vmem_limit = _chip_config()
    sub = _sublane_multiple(x.dtype, t.dtype)

    rows_total = n // _LANES
    splits = wanted_splits if rows_total >= wanted_splits * sub else 1
    have_bulk = rows_total >= splits * sub

    total = jnp.float32(0.0)
    bulk_elems = 0

    if have_bulk:
        # Choose (steps, row_block) so splits*steps*row_block <= rows_total with
        # row_block a sublane multiple <= max_rows; leftover rows go to the jnp
        # tail below (no full-array pad, no extra HBM pass).
        rb0 = min(max_rows, _round_down(rows_total // splits, sub))
        steps = pl.cdiv(rows_total, splits * rb0)
        row_block = _round_down(rows_total // (splits * steps), sub)
        if row_block < sub:
            row_block = sub
            steps = rows_total // (splits * sub)
        bulk_rows = splits * steps * row_block
        bulk_elems = bulk_rows * _LANES

        if rows_total * _LANES == n:
            # Pure bitcast view; the index_map simply never touches trailing rows.
            x2d = x.reshape(rows_total, _LANES)
            t2d = t.reshape(rows_total, _LANES)
        else:
            # TODO(synk): for lane-misaligned n XLA may materialize this prefix
            # slice; realistic inputs are 128-aligned so the hot path is copy-free.
            x2d = x[:bulk_elems].reshape(bulk_rows, _LANES)
            t2d = t[:bulk_elems].reshape(bulk_rows, _LANES)

        tile_spec = pl.BlockSpec((row_block, _LANES),
                                 lambda c, s, _steps=steps: (c * _steps + s, 0))

        if splits > 1:
            # Guarantee the 2-TensorCore split on v7x.
            dim_sem = (getattr(pltpu, "CORE_PARALLEL", pltpu.PARALLEL),
                       pltpu.ARBITRARY)
        else:
            dim_sem = (pltpu.ARBITRARY, pltpu.ARBITRARY)

        cost = pl.CostEstimate(
            flops=8 * bulk_elems,
            transcendentals=3 * bulk_elems,
            bytes_accessed=bulk_elems * (np.dtype(x.dtype).itemsize
                                         + np.dtype(t.dtype).itemsize) + 4 * splits,
        )

        partials = pl.pallas_call(
            _focal_bce_kernel,
            out_shape=jax.ShapeDtypeStruct((splits, 1, 1), jnp.float32),
            grid_spec=pltpu.PrefetchScalarGridSpec(
                num_scalar_prefetch=0,
                grid=(splits, steps),
                in_specs=[tile_spec, tile_spec],
                out_specs=pl.BlockSpec((1, 1, 1), lambda c, s: (c, 0, 0)),
                scratch_shapes=[pltpu.VMEM((8, _LANES), jnp.float32)],
            ),
            compiler_params=pltpu.CompilerParams(
                dimension_semantics=dim_sem,
                vmem_limit_bytes=vmem_limit,
            ),
            cost_estimate=cost,
        )(x2d, t2d)
        total = total + jnp.sum(partials)

    if bulk_elems < n:
        # Tail: < sub*splits rows plus the sub-lane remainder — tiny, plain jnp.
        total = total + _bce_sum_tail(x[bulk_elems:], t[bulk_elems:])

    mean_bce = total / n
    bce_exp = jnp.exp(-mean_bce)
    return alpha * (1.0 - bce_exp) ** gamma * mean_bce


def _focal_loss_ref(inputs, targets, alpha=0.1, gamma=2.0):
    p = jax.nn.sigmoid(jax.nn.sigmoid(inputs.reshape(-1).astype(jnp.float32)))
    t = targets.reshape(-1).astype(jnp.float32)
    bce = -jnp.mean(t * jnp.maximum(jnp.log(p), -100.0)
                    + (1.0 - t) * jnp.maximum(jnp.log1p(-p), -100.0))
    return alpha * (1.0 - jnp.exp(-bce)) ** gamma * bce


if __name__ == "__main__":
    key = jax.random.PRNGKey(0)
    k1, k2 = jax.random.split(key)
    inputs = jax.random.normal(k1, (2, 4, 16, 16), dtype=jnp.float32)
    targets = (jax.random.uniform(k2, (2, 4, 16, 16)) > 0.5).astype(jnp.float32)

    loss = my_focal_loss(inputs, targets)
    jax.block_until_ready(loss)
    np.testing.assert_allclose(np.asarray(loss),
                               np.asarray(_focal_loss_ref(inputs, targets)),
                               rtol=1e-5, atol=1e-6)

    # lane-misaligned total: exercises kernel bulk + jnp tail combined path.
    k3, k4 = jax.random.split(k2)
    xm = jax.random.normal(k3, (3, 24, 37), dtype=jnp.float32)
    tm = (jax.random.uniform(k4, (3, 24, 37)) > 0.5).astype(jnp.float32)
    loss2 = my_focal_loss(xm, tm)
    jax.block_until_ready(loss2)
    np.testing.assert_allclose(np.asarray(loss2),
                               np.asarray(_focal_loss_ref(xm, tm)),
                               rtol=1e-5, atol=1e-6)

    # tiny input: pure-tail (no kernel) path.
    k5, k6 = jax.random.split(k4)
    xi = jax.random.normal(k5, (3, 5, 7), dtype=jnp.float32)
    ti = (jax.random.uniform(k6, (3, 5, 7)) > 0.5).astype(jnp.float32)
    loss3 = my_focal_loss(xi, ti)
    jax.block_until_ready(loss3)
    np.testing.assert_allclose(np.asarray(loss3),
                               np.asarray(_focal_loss_ref(xi, ti)),
                               rtol=1e-5, atol=1e-6)

    print("KERNEL_OK")
</pallas_src>

<mosaic_0001>
module attributes {stable_mosaic.version = 11 : i64} {
  func.func @_focal_bce_kernel(%arg0: i32, %arg1: i32, %arg2: memref<16x128xf32, #tpu.memory_space<vmem>>, %arg3: memref<16x128xf32, #tpu.memory_space<vmem>>, %arg4: memref<1x1x1xf32, #tpu.memory_space<vmem>>, %arg5: memref<8x128xf32, #tpu.memory_space<vmem>>) attributes {dimension_semantics = [#tpu.dimension_semantics<arbitrary>, #tpu.dimension_semantics<arbitrary>], iteration_bounds = array<i64: 1, 1>, scalar_prefetch = 0 : i64, scratch_operands = 1 : i64, tpu.core_type = #tpu.core_type<tc>, window_params = [{transform_indices = @transform_0, window_bounds = array<i64: 16, 128>}, {transform_indices = @transform_1, window_bounds = array<i64: 16, 128>}, {transform_indices = @transform_2, window_bounds = array<i64: 1, 1, 1>}]} {
    %c0_i32 = arith.constant 0 : i32
    %0 = arith.cmpi eq, %arg1, %c0_i32 : i32
    %1 = arith.extui %0 : i1 to i32
    %c0_i32_0 = arith.constant 0 : i32
    %2 = arith.cmpi ne, %1, %c0_i32_0 : i32
    scf.if %2 {
      %cst_13 = arith.constant 0.000000e+00 : f32
      %24 = vector.broadcast %cst_13 : f32 to vector<8x128xf32>
      %c0_14 = arith.constant 0 : index
      %c0_15 = arith.constant 0 : index
      %25 = vector.load %arg5[%c0_14, %c0_15] : memref<8x128xf32, #tpu.memory_space<vmem>>, vector<8x128xf32>
      tpu.vector_store %arg5[%c0_14, %c0_15], %24 {strides = array<i32>} : memref<8x128xf32, #tpu.memory_space<vmem>>, vector<8x128xf32>,
    } else {
    }
    %c0 = arith.constant 0 : index
    %c0_1 = arith.constant 0 : index
    %3 = vector.load %arg2[%c0, %c0_1] : memref<16x128xf32, #tpu.memory_space<vmem>>, vector<16x128xf32>
    %c0_2 = arith.constant 0 : index
    %c0_3 = arith.constant 0 : index
    %4 = vector.load %arg3[%c0_2, %c0_3] : memref<16x128xf32, #tpu.memory_space<vmem>>, vector<16x128xf32>
    %cst = arith.constant 5.000000e-01 : f32
    %5 = vector.broadcast %cst : f32 to vector<16x128xf32>
    %6 = arith.mulf %5, %3 : vector<16x128xf32>
    %7 = math.tanh %6 : vector<16x128xf32>
    %cst_4 = arith.constant 5.000000e-01 : f32
    %8 = vector.broadcast %cst_4 : f32 to vector<16x128xf32>
    %9 = arith.mulf %8, %7 : vector<16x128xf32>
    %cst_5 = arith.constant 5.000000e-01 : f32
    %10 = vector.broadcast %cst_5 : f32 to vector<16x128xf32>
    %11 = arith.addf %9, %10 : vector<16x128xf32>
    %12 = math.exp %11 : vector<16x128xf32>
    %13 = math.log1p %12 : vector<16x128xf32>
    %14 = arith.mulf %4, %11 : vector<16x128xf32>
    %15 = arith.subf %13, %14 : vector<16x128xf32>
    %c0_6 = arith.constant 0 : index
    %c0_7 = arith.constant 0 : index
    %16 = vector.load %arg5[%c0_6, %c0_7] : memref<8x128xf32, #tpu.memory_space<vmem>>, vector<8x128xf32>
    %17 = vector.shape_cast %15 : vector<16x128xf32> to vector<2x8x128xf32>
    %cst_8 = arith.constant dense<0.000000e+00> : vector<8x128xf32>
    %18 = vector.multi_reduction <add>, %17, %cst_8 [0] : vector<2x8x128xf32> to vector<8x128xf32>
    %19 = arith.addf %16, %18 : vector<8x128xf32>
    %c0_9 = arith.constant 0 : index
    %c0_10 = arith.constant 0 : index
    %20 = vector.load %arg5[%c0_9, %c0_10] : memref<8x128xf32, #tpu.memory_space<vmem>>, vector<8x128xf32>
    tpu.vector_store %arg5[%c0_9, %c0_10], %19 {strides = array<i32>} : memref<8x128xf32, #tpu.memory_space<vmem>>, vector<8x128xf32>,
    %c0_i32_11 = arith.constant 0 : i32
    %21 = arith.cmpi eq, %arg1, %c0_i32_11 : i32
    %22 = arith.extui %21 : i1 to i32
    %c0_i32_12 = arith.constant 0 : i32
    %23 = arith.cmpi ne, %22, %c0_i32_12 : i32
    scf.if %23 {
      %c0_13 = arith.constant 0 : index
      %c0_14 = arith.constant 0 : index
      %24 = vector.load %arg5[%c0_13, %c0_14] : memref<8x128xf32, #tpu.memory_space<vmem>>, vector<8x128xf32>
      %25 = vector.shape_cast %24 : vector<8x128xf32> to vector<1x8x128xf32>
      %cst_15 = arith.constant dense<0.000000e+00> : vector<1xf32>
      %26 = vector.multi_reduction <add>, %25, %cst_15 [1, 2] : vector<1x8x128xf32> to vector<1xf32>
      %27 = vector.shape_cast %26 : vector<1xf32> to vector<1x1x1xf32>
      %28 = vector.extract %27[0, 0, 0] : f32 from vector<1x1x1xf32>
      %29 = vector.broadcast %28 : f32 to vector<1x1x1xf32>
      %c0_16 = arith.constant 0 : index
      %c0_17 = arith.constant 0 : index
      %c0_18 = arith.constant 0 : index
      %30 = vector.load %arg4[%c0_16, %c0_17, %c0_18] : memref<1x1x1xf32, #tpu.memory_space<vmem>>, vector<1x1x1xf32>
      tpu.vector_store %arg4[%c0_16, %c0_17, %c0_18], %29 {strides = array<i32>} : memref<1x1x1xf32, #tpu.memory_space<vmem>>, vector<1x1x1xf32>,
    } else {
    }
    return
  }
  func.func @transform_0(%arg0: i32, %arg1: i32) -> (i32, i32) {
    %c1_i32 = arith.constant 1 : i32
    %0 = arith.muli %arg0, %c1_i32 : i32
    %1 = arith.addi %0, %arg1 : i32
    %c0_i32 = arith.constant 0 : i32
    %c0_i32_0 = arith.constant 0 : i32
    return %1, %c0_i32 : i32, i32
  }
  func.func @transform_1(%arg0: i32, %arg1: i32) -> (i32, i32) {
    %c1_i32 = arith.constant 1 : i32
    %0 = arith.muli %arg0, %c1_i32 : i32
    %1 = arith.addi %0, %arg1 : i32
    %c0_i32 = arith.constant 0 : i32
    %c0_i32_0 = arith.constant 0 : i32
    return %1, %c0_i32 : i32, i32
  }
  func.func @transform_2(%arg0: i32, %arg1: i32) -> (i32, i32, i32) {
    %c0_i32 = arith.constant 0 : i32
    %c0_i32_0 = arith.constant 0 : i32
    %c0_i32_1 = arith.constant 0 : i32
    return %arg0, %c0_i32, %c0_i32_0 : i32, i32, i32
  }
}

</mosaic_0001>

<llo_original>
// kernel: tpu_custom_call.1
$region0: #{tpu_custom_call.1}
  #allocation0 [shape = 'u32[]', space=smem, size = 0x4, offset = 0x4, fixed_abs, tag = 'smem constant byte address 0x4 - core index']
  #allocation1 [shape = 'u32[144,128]{1,0:T(1,128)}', space=vmem, size = 0x12000, scoped, tag = 'internal scratch']
  #allocation2 [shape = 'f32[8,128]{1,0:T(8,128)}', space=vmem, size = 0x1000, scoped, tag = 'scratch operand']
  %s0 = inlined_call_operand.hbm [shape: f32[16,128], index: 0, kind: input, shape index: {}]
  %s1 = inlined_call_operand.hbm [shape: f32[16,128], index: 1, kind: input, shape index: {}]
  %s2 = inlined_call_operand.hbm [shape: f32[1,1,1], index: 2, kind: output, shape index: {}]
  %s3 = sld [smem:[#allocation0]]
  $region34: #{tpu_custom_call.1} parent=0
    _
  %s5 = ssub.s32 1, %s3
  %s6 = scalar_select 0, %s5, %s3
  $region1: #{tpu_custom_call.1} parent=0
    #allocation3 [shape = 'u8[8192]{0}', space=vmem, size = 0x2000, scoped, tag = 'input window, operand 0, single buffered']
    #allocation4 [shape = 's32[1]{0}', space=sflag, size = 0x4, scoped, tag = 'scoped memory for tpu_custom_call.1']
    #allocation5 [shape = 's32[1]{0}', space=sflag, size = 0x4, scoped, tag = 'scoped memory for tpu_custom_call.1']
    #allocation6 [shape = 'u8[8192]{0}', space=vmem, size = 0x2000, scoped, tag = 'input window, operand 1, single buffered']
    #allocation7 [shape = 's32[1]{0}', space=sflag, size = 0x4, scoped, tag = 'scoped memory for tpu_custom_call.1']
    #allocation8 [shape = 'u8[512]{0}', space=vmem, size = 0x400, scoped, tag = 'output window, operand 0, single buffered']
    %7 = vsyncpa [#allocation4], 0
    %8 = vsyncpa [#allocation7], 0
    %9 = vsyncpa [#allocation5], 0
    // Predicated region
    $region2: #{tpu_custom_call.1} parent=1 // pred_check
      _
    $region3: #{tpu_custom_call.1} parent=1 // pred_check_branch
      %11 = sbr.rel (0) target = $region5
    $region4: #{tpu_custom_call.1} parent=1 // pred_region
      %s12 = sadd.s32 0, 0
      %s13 = smul.u32 2, %s12
      %s15 = ssub.s32 256, 256
      %16 = vsyncadd [#allocation4], %s15
      %s17 = smul.addr %s13, 128
      %s18 = scalar_lea.hbm %s0, %s17
      %s19 = sshll.u32 [#allocation3], 4
      %s20 = int_to_ptr.vmem [resolvable:$true] %s19
      %25 = dma.hbm_to_vmem [thread:$0]  %s18, 256, %s20, [#allocation4], 128, 128, 8
    $region5: #{tpu_custom_call.1} parent=1 // pred_fallthru
      _
    // Predicated region
    $region6: #{tpu_custom_call.1} parent=1 // pred_check
      _
    $region7: #{tpu_custom_call.1} parent=1 // pred_check_branch
      %27 = sbr.rel (0) target = $region9
    $region8: #{tpu_custom_call.1} parent=1 // pred_region
      %s28 = sadd.s32 0, 0
      %s29 = smul.u32 2, %s28
      %s31 = ssub.s32 256, 256
      %32 = vsyncadd [#allocation7], %s31
      %s33 = smul.addr %s29, 128
      %s34 = scalar_lea.hbm %s1, %s33
      %s35 = sshll.u32 [#allocation6], 4
      %s36 = int_to_ptr.vmem [resolvable:$true] %s35
      %41 = dma.hbm_to_vmem [thread:$0]  %s34, 256, %s36, [#allocation7], 128, 128, 8
    $region9: #{tpu_custom_call.1} parent=1 // pred_fallthru
      _
    // Predicated region
    $region10: #{tpu_custom_call.1} parent=1 // pred_check
      _
    $region11: #{tpu_custom_call.1} parent=1 // pred_check_branch
      %43 = sbr.rel (0) target = $region13
    $region12: #{tpu_custom_call.1} parent=1 // pred_region
      %44 = dma.done [#allocation4], 256
    $region13: #{tpu_custom_call.1} parent=1 // pred_fallthru
      _
    // Predicated region
    $region14: #{tpu_custom_call.1} parent=1 // pred_check
      _
    $region15: #{tpu_custom_call.1} parent=1 // pred_check_branch
      %46 = sbr.rel (0) target = $region17
    $region16: #{tpu_custom_call.1} parent=1 // pred_region
      %47 = dma.done [#allocation7], 256
    $region17: #{tpu_custom_call.1} parent=1 // pred_fallthru
      _
    %s48 = sadd.s32 0, 0
    %s49 = smul.u32 2, %s48
    %s50 = sadd.s32 0, 0
    %s51 = smul.u32 2, %s50
    %p52 = scmp.eq.s32.totalorder 0, 0
    // Predicated region
    $region18: #{tpu_custom_call.1} parent=1 // pred_check
      %p53 = pneg %p52
    $region19: #{tpu_custom_call.1} parent=1 // pred_check_branch
      %55 = sbr.rel (%p53) target = $region21
    $region20: #{tpu_custom_call.1} parent=1 // pred_region
      %56 = vst [vmem:[#allocation2] sm:$0xff] 0.0
    $region21: #{tpu_custom_call.1} parent=1 // pred_fallthru
      _
    %v57 = vld [vmem:[#allocation3] sm:$0xff]
    %v58 = vld [vmem:[#allocation3 + $0x8] sm:$0xff]
    %v59 = vld [vmem:[#allocation6] sm:$0xff]
    %v60 = vld [vmem:[#allocation6 + $0x8] sm:$0xff]
    %v61 = vmul.f32 %v57, 0.5
    %v62 = vmul.f32 %v58, 0.5
    %v63 = vtanh.pop %v61
    %v64 = vtanh.pop %v62
    %v65 = vmul.f32 %v63, 0.5
    %v66 = vmul.f32 %v64, 0.5
    %v67 = vadd.f32 %v65, 0.5
    %v68 = vadd.f32 %v66, 0.5
    %v69 = vmul.f32 %v67, 1.442695
    %v70 = vpow.pop %v69
    %v71 = vmul.f32 %v68, 1.442695
    %v72 = vpow.pop %v71
    %v73 = vadd.f32 %v70, 1.0
    %v74 = vlog2.pop %v73
    %v75 = vmul.f32 %v74, 0.6931472
    %v76 = vmul.f32 -0.5, %v70
    %v77 = vadd.f32 %v76, 1.0
    %v78 = vmul.f32 %v77, %v70
    %v79 = vand.u32 2147483647, %v70
    %vm80 = vcmp.lt.f32.partialorder %v79, 0.0004427343
    %v81 = vsel %vm80, %v78, %v75
    %v82 = vadd.f32 %v72, 1.0
    %v83 = vlog2.pop %v82
    %v84 = vmul.f32 %v83, 0.6931472
    %v85 = vmul.f32 -0.5, %v72
    %v86 = vadd.f32 %v85, 1.0
    %v87 = vmul.f32 %v86, %v72
    %v88 = vand.u32 2147483647, %v72
    %vm89 = vcmp.lt.f32.partialorder %v88, 0.0004427343
    %v90 = vsel %vm89, %v87, %v84
    %v91 = vmul.f32 %v59, %v67
    %v92 = vmul.f32 %v60, %v68
    %v93 = vsub.f32 %v81, %v91
    %v94 = vsub.f32 %v90, %v92
    %v95 = vld [vmem:[#allocation2] sm:$0xff]
    %v96 = vadd.f32 %v93, %v94
    %v97 = vadd.f32 %v95, %v96
    %98 = vst [vmem:[#allocation2] sm:$0xff] %v97
    // Predicated region
    $region22: #{tpu_custom_call.1} parent=1 // pred_check
      %p99 = pneg %p52
    $region23: #{tpu_custom_call.1} parent=1 // pred_check_branch
      %101 = sbr.rel (%p99) target = $region25
    $region24: #{tpu_custom_call.1} parent=1 // pred_region
      %v102 = vld [vmem:[#allocation2] sm:$0xff]
      %103 = vadd.xlane.f32.xlu0 %v102
      %v104 = vpop.xlane.xlu0 %103
      %v105 = vrot.slane %v104, 4
      %v106 = vadd.f32 %v104, %v105
      %v107 = vrot.slane %v106, 2
      %v108 = vadd.f32 %v106, %v107
      %v109 = vrot.slane %v108, 1
      %v110 = vadd.f32 %v108, %v109
      %s111 = vtos %v110
      %v112 = vstv %s111
      %vm113 = vcmask 0
      %114 = vst.msk [vmem:[#allocation8] sm:$0x1] %vm113, %v112
    $region25: #{tpu_custom_call.1} parent=1 // pred_fallthru
      _
    // Predicated region
    $region26: #{tpu_custom_call.1} parent=1 // pred_check
      _
    $region27: #{tpu_custom_call.1} parent=1 // pred_check_branch
      %116 = sbr.rel (0) target = $region29
    $region28: #{tpu_custom_call.1} parent=1 // pred_region
      %s118 = ssub.s32 16, 16
      %119 = vsyncadd [#allocation5], %s118
      %s121 = sshll.u32 [#allocation8], 4
      %s122 = int_to_ptr.vmem [resolvable:$true] %s121
      %124 = dma.vmem_to_hbm [thread:$0]  %s122, 16, %s2, [#allocation5]
    $region29: #{tpu_custom_call.1} parent=1 // pred_fallthru
      _
    // Predicated region
    $region30: #{tpu_custom_call.1} parent=1 // pred_check
      _
    $region31: #{tpu_custom_call.1} parent=1 // pred_check_branch
      %126 = sbr.rel (0) target = $region33
    $region32: #{tpu_custom_call.1} parent=1 // pred_region
      %127 = dma.done [#allocation5], 16
    $region33: #{tpu_custom_call.1} parent=1 // pred_fallthru
      _
    %128 = vsyncpa [#allocation4], 1
    %129 = vsyncpa [#allocation7], 1
    %130 = vsyncpa [#allocation5], 1

</llo_original>
